<compile_context>
chip_gen: v5e
topology: v5e:2x2
jax: 0.10.0
libtpu: 0.0.40
codegen_flags: <defaults>
</compile_context>

<pallas_src>
import functools
import math

import jax
import jax.numpy as jnp
from jax import lax
from jax.experimental import pallas as pl
from jax.experimental.pallas import tpu as pltpu


_VMEM_LIMIT = 32 * 1024 * 1024  # safe on v5e/v6e/v7x; tiles below fit easily


def _fit_tile(dim, target):
    """Largest tile <= target that divides dim (prefers target)."""
    if dim <= target:
        return dim
    if dim % target == 0:
        return target
    for t in range(target, 0, -128):
        if t > 0 and dim % t == 0:
            return t
    # TODO(synk): pad ragged dims instead of falling back to a full-dim tile.
    return dim


# ----------------------------------------------------------------------------
# Kernel 1: tiled bias-free matmul  y = x @ w_t   (w_t is (K, N))
# ----------------------------------------------------------------------------
def _matmul_kernel(x_ref, w_ref, o_ref, acc_ref):
    @pl.when(pl.program_id(2) == 0)
    def _():
        acc_ref[...] = jnp.zeros_like(acc_ref)

    acc_ref[...] += jnp.dot(
        x_ref[...], w_ref[...], preferred_element_type=jnp.float32
    )

    @pl.when(pl.program_id(2) == pl.num_programs(2) - 1)
    def _():
        o_ref[...] = acc_ref[...].astype(o_ref.dtype)


def matmul_nobias(x, w_t, *, out_dtype=None, tm=256, tn=256, tk=512):
    """x: (M, K), w_t: (K, N) -> (M, N). Tiled + pipelined, megacore-friendly."""
    M, K = x.shape
    K2, N = w_t.shape
    assert K == K2
    out_dtype = out_dtype if out_dtype is not None else x.dtype
    tm = _fit_tile(M, tm)
    tn = _fit_tile(N, tn)
    tk = _fit_tile(K, tk)

    flops = 2 * M * N * K
    bytes_accessed = (M * K + K * N) * x.dtype.itemsize + M * N * jnp.dtype(out_dtype).itemsize

    return pl.pallas_call(
        _matmul_kernel,
        out_shape=jax.ShapeDtypeStruct((M, N), out_dtype),
        grid=(M // tm, N // tn, K // tk),
        in_specs=[
            pl.BlockSpec((tm, tk), lambda i, j, k: (i, k)),
            pl.BlockSpec((tk, tn), lambda i, j, k: (k, j)),
        ],
        out_specs=pl.BlockSpec((tm, tn), lambda i, j, k: (i, j)),
        scratch_shapes=[pltpu.VMEM((tm, tn), jnp.float32)],
        compiler_params=pltpu.CompilerParams(
            dimension_semantics=("parallel", "parallel", "arbitrary"),
            vmem_limit_bytes=_VMEM_LIMIT,
        ),
        cost_estimate=pl.CostEstimate(
            flops=flops, transcendentals=0, bytes_accessed=int(bytes_accessed)
        ),
    )(x, w_t)


# ----------------------------------------------------------------------------
# Kernel 2: flash-style attention per (batch, head, q-tile), online softmax
#   over K tiles; mask is applied as an additive (tq, tk) bias tile.
# ----------------------------------------------------------------------------
def _flash_attn_kernel(q_ref, k_ref, v_ref, bias_ref, o_ref,
                       m_sc, l_sc, acc_sc, *, sm_scale):
    ki = pl.program_id(3)

    @pl.when(ki == 0)
    def _():
        m_sc[...] = jnp.full(m_sc.shape, -jnp.inf, dtype=m_sc.dtype)
        l_sc[...] = jnp.zeros(l_sc.shape, dtype=l_sc.dtype)
        acc_sc[...] = jnp.zeros(acc_sc.shape, dtype=acc_sc.dtype)

    q = q_ref[0, 0]          # (tq, D)
    k = k_ref[0, 0]          # (tk, D)
    v = v_ref[0, 0]          # (tk, D)

    # Contract on D for both operands -> MXU directly, no k.T / XLU transpose.
    s = lax.dot_general(
        q, k, (((1,), (1,)), ((), ())), preferred_element_type=jnp.float32
    )
    s = s * sm_scale + bias_ref[...]          # additive mask bias (0 / -1e9)

    m_prev = m_sc[...]
    m_new = jnp.maximum(m_prev, jnp.max(s, axis=-1, keepdims=True))
    alpha = jnp.exp(m_prev - m_new)
    p = jnp.exp(s - m_new)

    l_sc[...] = alpha * l_sc[...] + jnp.sum(p, axis=-1, keepdims=True)
    acc_sc[...] = alpha * acc_sc[...] + jnp.dot(
        p.astype(v.dtype), v, preferred_element_type=jnp.float32
    )
    m_sc[...] = m_new

    @pl.when(ki == pl.num_programs(3) - 1)
    def _():
        # Deferred normalization: one (tq, D) scale at the end instead of
        # scaling the (tq, tk) probs every K step. (approx=True would route
        # this to the EUP; exact form kept for tight parity with the reference.)
        inv_l = pl.reciprocal(l_sc[...], approx=False)
        o_ref[0, 0] = (acc_sc[...] * inv_l).astype(o_ref.dtype)


def flash_attention(q, k, v, bias, *, out_dtype=None, tq=256, tk=256):
    """q: (B,H,Sq,D), k/v: (B,H,Sk,D), bias: (Sq,Sk) f32 additive mask -> (B,H,Sq,D)."""
    B, H, Sq, D = q.shape
    Sk = k.shape[2]
    out_dtype = out_dtype if out_dtype is not None else q.dtype
    tq = _fit_tile(Sq, tq)
    tk = _fit_tile(Sk, tk)
    sm_scale = 1.0 / math.sqrt(D)

    flops = 4 * B * H * Sq * Sk * D               # two matmuls
    transcendentals = B * H * Sq * Sk             # exp
    bytes_accessed = (
        (q.size + k.size + v.size) * q.dtype.itemsize
        + Sq * Sk * 4
        + B * H * Sq * D * jnp.dtype(out_dtype).itemsize
    )

    kernel = functools.partial(_flash_attn_kernel, sm_scale=sm_scale)

    return pl.pallas_call(
        kernel,
        out_shape=jax.ShapeDtypeStruct((B, H, Sq, D), out_dtype),
        grid=(B, H, Sq // tq, Sk // tk),
        in_specs=[
            pl.BlockSpec((1, 1, tq, D), lambda b, h, qi, ki: (b, h, qi, 0)),
            pl.BlockSpec((1, 1, tk, D), lambda b, h, qi, ki: (b, h, ki, 0)),
            pl.BlockSpec((1, 1, tk, D), lambda b, h, qi, ki: (b, h, ki, 0)),
            pl.BlockSpec((tq, tk), lambda b, h, qi, ki: (qi, ki)),
        ],
        out_specs=pl.BlockSpec((1, 1, tq, D), lambda b, h, qi, ki: (b, h, qi, 0)),
        scratch_shapes=[
            pltpu.VMEM((tq, 1), jnp.float32),   # running max m
            pltpu.VMEM((tq, 1), jnp.float32),   # running denom l
            pltpu.VMEM((tq, D), jnp.float32),   # unnormalized accumulator
        ],
        compiler_params=pltpu.CompilerParams(
            dimension_semantics=("parallel", "parallel", "parallel", "arbitrary"),
            vmem_limit_bytes=_VMEM_LIMIT,
        ),
        cost_estimate=pl.CostEstimate(
            flops=flops,
            transcendentals=transcendentals,
            bytes_accessed=int(bytes_accessed),
        ),
    )(q, k, v, bias)


# ----------------------------------------------------------------------------
# Parameter init (PyTorch-style) and one-time packing (pre-transposed / fused)
# ----------------------------------------------------------------------------
def init_mha_params(key, d_model):
    """nn.Linear default init U(-1/sqrt(in), 1/sqrt(in)); weights are (out, in)."""
    ks = jax.random.split(key, 4)
    bound = 1.0 / math.sqrt(d_model)

    def w(k):
        return jax.random.uniform(
            k, (d_model, d_model), jnp.float32, minval=-bound, maxval=bound
        )

    return {
        "query_weight": w(ks[0]),
        "key_weight": w(ks[1]),
        "value_weight": w(ks[2]),
        "final_weight": w(ks[3]),
    }


def pack_mha_params(params):
    """Pre-transpose (and fuse Q|K|V) once, outside the hot forward path."""
    wq_t = params["query_weight"].T
    wk_t = params["key_weight"].T
    wv_t = params["value_weight"].T
    return {
        "w_qkv_t": jnp.concatenate([wq_t, wk_t, wv_t], axis=1),   # (d, 3d)
        "w_q_t": wq_t,
        "w_k_t": wk_t,
        "w_v_t": wv_t,
        "w_out_t": params["final_weight"].T,
    }


# ----------------------------------------------------------------------------
# Forward pass (matches the PyTorch module semantics, eval mode)
# ----------------------------------------------------------------------------
def multi_head_attention_forward(packed, query, key, value,
                                 freqs_complex_form, mask, heads,
                                 matmul_dtype=None):
    """query: (B, Sq, d_model); key/value: (B, Sk, d_model);
    mask: broadcastable (1, 1, Sq, Sk) 0/1 mask or None.
    matmul_dtype=jnp.bfloat16 uses bf16 MXU inputs w/ f32 accumulation (v6e/v7x)."""
    del freqs_complex_form  # unused in the reference forward
    B, Sq, d_model = query.shape
    Sk = key.shape[1]
    assert d_model % heads == 0, "cannot divide d_model by heads"
    D = d_model // heads
    out_dtype = query.dtype

    if matmul_dtype is None:
        cast = lambda a: a
    else:
        cast = lambda a: a.astype(matmul_dtype)

    # ---- projections (nn.Linear, no bias): y = x @ W.T ----
    if (query is key) and (key is value):
        # self-attention fast path: one fused x @ [Wq | Wk | Wv]
        y = matmul_nobias(
            cast(query.reshape(B * Sq, d_model)), cast(packed["w_qkv_t"]),
            out_dtype=out_dtype,
        )
        q3 = y[:, 0 * d_model:1 * d_model].reshape(B, Sq, d_model)
        k3 = y[:, 1 * d_model:2 * d_model].reshape(B, Sk, d_model)
        v3 = y[:, 2 * d_model:3 * d_model].reshape(B, Sk, d_model)
    else:
        q3 = matmul_nobias(cast(query.reshape(B * Sq, d_model)),
                           cast(packed["w_q_t"]), out_dtype=out_dtype
                           ).reshape(B, Sq, d_model)
        k3 = matmul_nobias(cast(key.reshape(B * Sk, d_model)),
                           cast(packed["w_k_t"]), out_dtype=out_dtype
                           ).reshape(B, Sk, d_model)
        v3 = matmul_nobias(cast(value.reshape(B * Sk, d_model)),
                           cast(packed["w_v_t"]), out_dtype=out_dtype
                           ).reshape(B, Sk, d_model)

    # ---- head split (wrapper-side XLA relayout, see header comment) ----
    def split_heads(x, S):
        return x.reshape(B, S, heads, D).transpose(0, 2, 1, 3)

    qh, kh, vh = split_heads(q3, Sq), split_heads(k3, Sk), split_heads(v3, Sk)

    # ---- mask -> small additive bias (built once; kernel reads (tq,tk) tiles) ----
    if mask is None:
        bias = jnp.zeros((Sq, Sk), jnp.float32)
    else:
        assert all(int(d) == 1 for d in mask.shape[:-2]), \
            "mask must broadcast over batch & heads (leading dims of size 1)"
        m2 = mask.reshape(mask.shape[-2], mask.shape[-1])
        bias = jnp.where(m2 == 0, jnp.float32(-1e9), jnp.float32(0.0))
        # NOTE: a fully-masked query row degenerates to plain softmax of the raw
        # scores here (vs. uniform in masked_fill); both are meaningless rows.

    attn_out = flash_attention(cast(qh), cast(kh), cast(vh), bias,
                               out_dtype=out_dtype)          # (B, H, Sq, D)

    # dropout(p=0.1) on attention probs -> identity (eval mode)
    merged = attn_out.transpose(0, 2, 1, 3).reshape(B, Sq, d_model)
    out = matmul_nobias(cast(merged.reshape(B * Sq, d_model)),
                        cast(packed["w_out_t"]), out_dtype=out_dtype)
    return out.reshape(B, Sq, d_model)


# ----------------------------------------------------------------------------
# Pure-JAX reference for a correctness sanity check
# ----------------------------------------------------------------------------
def reference_forward(params, query, key, value, mask, heads):
    B, Sq, d_model = query.shape
    Sk = key.shape[1]
    D = d_model // heads
    q = query @ params["query_weight"].T
    k = key @ params["key_weight"].T
    v = value @ params["value_weight"].T

    def split(x, S):
        return x.reshape(B, S, heads, D).transpose(0, 2, 1, 3)

    qh, kh, vh = split(q, Sq), split(k, Sk), split(v, Sk)
    scores = jnp.einsum("bhqd,bhkd->bhqk", qh, kh) / math.sqrt(D)
    if mask is not None:
        scores = jnp.where(mask == 0, -1e9, scores)
    attn = jax.nn.softmax(scores, axis=-1)
    out = jnp.einsum("bhqk,bhkd->bhqd", attn, vh)
    out = out.transpose(0, 2, 1, 3).reshape(B, Sq, d_model)
    return out @ params["final_weight"].T


if __name__ == "__main__":
    B, S, d_model, heads = 2, 8, 32, 4

    root = jax.random.PRNGKey(0)
    k_param, k_x, k_kv = jax.random.split(root, 3)

    params = init_mha_params(k_param, d_model)
    packed = pack_mha_params(params)

    # --- test 1: self-attention with a causal mask (fused-QKV path) ---
    x = jax.random.normal(k_x, (B, S, d_model), jnp.float32)
    mask = jnp.tril(jnp.ones((S, S), jnp.float32))[None, None]   # (1, 1, S, S)
    freqs_complex_form = None  # unused, as in the reference module

    out = multi_head_attention_forward(
        packed, x, x, x, freqs_complex_form, mask, heads
    )
    out = jax.block_until_ready(out)
    ref = reference_forward(params, x, x, x, mask, heads)
    assert out.shape == (B, S, d_model)
    assert jnp.allclose(out, ref, atol=1e-2, rtol=1e-2), "self-attn mismatch"

    # --- test 2: cross-attention (different K/V length), no mask ---
    Sk = 16
    kv = jax.random.normal(k_kv, (B, Sk, d_model), jnp.float32)
    out2 = jax.block_until_ready(
        multi_head_attention_forward(packed, x, kv, kv, None, None, heads)
    )
    ref2 = reference_forward(params, x, kv, kv, None, heads)
    assert out2.shape == (B, S, d_model)
    assert jnp.allclose(out2, ref2, atol=1e-2, rtol=1e-2), "cross-attn mismatch"

    print("KERNEL_OK")
</pallas_src>

<mosaic_0001>
module attributes {stable_mosaic.version = 11 : i64} {
  func.func @_matmul_kernel(%arg0: i32, %arg1: i32, %arg2: i32, %arg3: memref<16x32xf32, #tpu.memory_space<vmem>>, %arg4: memref<32x96xf32, #tpu.memory_space<vmem>>, %arg5: memref<16x96xf32, #tpu.memory_space<vmem>>, %arg6: memref<16x96xf32, #tpu.memory_space<vmem>>) attributes {dimension_semantics = [#tpu.dimension_semantics<parallel>, #tpu.dimension_semantics<parallel>, #tpu.dimension_semantics<arbitrary>], iteration_bounds = array<i64: 1, 1, 1>, scalar_prefetch = 0 : i64, scratch_operands = 1 : i64, tpu.core_type = #tpu.core_type<tc>, window_params = [{transform_indices = @transform_0, window_bounds = array<i64: 16, 32>}, {transform_indices = @transform_1, window_bounds = array<i64: 32, 96>}, {transform_indices = @transform_2, window_bounds = array<i64: 16, 96>}]} {
    %c0_i32 = arith.constant 0 : i32
    %0 = arith.cmpi eq, %arg2, %c0_i32 : i32
    %1 = arith.extui %0 : i1 to i32
    %c0_i32_0 = arith.constant 0 : i32
    %2 = arith.cmpi ne, %1, %c0_i32_0 : i32
    scf.if %2 {
      %cst_10 = arith.constant 0.000000e+00 : f32
      %12 = vector.broadcast %cst_10 : f32 to vector<16x96xf32>
      %c0_11 = arith.constant 0 : index
      %c0_12 = arith.constant 0 : index
      %13 = vector.load %arg6[%c0_11, %c0_12] : memref<16x96xf32, #tpu.memory_space<vmem>>, vector<16x96xf32>
      tpu.vector_store %arg6[%c0_11, %c0_12], %12 {strides = array<i32>} : memref<16x96xf32, #tpu.memory_space<vmem>>, vector<16x96xf32>,
    } else {
    }
    %c0 = arith.constant 0 : index
    %c0_1 = arith.constant 0 : index
    %3 = vector.load %arg6[%c0, %c0_1] : memref<16x96xf32, #tpu.memory_space<vmem>>, vector<16x96xf32>
    %c0_2 = arith.constant 0 : index
    %c0_3 = arith.constant 0 : index
    %4 = vector.load %arg3[%c0_2, %c0_3] : memref<16x32xf32, #tpu.memory_space<vmem>>, vector<16x32xf32>
    %c0_4 = arith.constant 0 : index
    %c0_5 = arith.constant 0 : index
    %5 = vector.load %arg4[%c0_4, %c0_5] : memref<32x96xf32, #tpu.memory_space<vmem>>, vector<32x96xf32>
    %cst = arith.constant dense<0.000000e+00> : vector<16x96xf32>
    %6 = tpu.matmul %4, %5, %cst {dimension_numbers = #tpu.dot_dimension_numbers<[1], [0], [0], [1], [0, 0, 1, 1], [], []>} : vector<16x32xf32>, vector<32x96xf32>, vector<16x96xf32> -> vector<16x96xf32>
    %7 = arith.addf %3, %6 : vector<16x96xf32>
    %c0_6 = arith.constant 0 : index
    %c0_7 = arith.constant 0 : index
    %8 = vector.load %arg6[%c0_6, %c0_7] : memref<16x96xf32, #tpu.memory_space<vmem>>, vector<16x96xf32>
    tpu.vector_store %arg6[%c0_6, %c0_7], %7 {strides = array<i32>} : memref<16x96xf32, #tpu.memory_space<vmem>>, vector<16x96xf32>,
    %c0_i32_8 = arith.constant 0 : i32
    %9 = arith.cmpi eq, %arg2, %c0_i32_8 : i32
    %10 = arith.extui %9 : i1 to i32
    %c0_i32_9 = arith.constant 0 : i32
    %11 = arith.cmpi ne, %10, %c0_i32_9 : i32
    scf.if %11 {
      %c0_10 = arith.constant 0 : index
      %c0_11 = arith.constant 0 : index
      %12 = vector.load %arg6[%c0_10, %c0_11] : memref<16x96xf32, #tpu.memory_space<vmem>>, vector<16x96xf32>
      %c0_12 = arith.constant 0 : index
      %c0_13 = arith.constant 0 : index
      %13 = vector.load %arg5[%c0_12, %c0_13] : memref<16x96xf32, #tpu.memory_space<vmem>>, vector<16x96xf32>
      tpu.vector_store %arg5[%c0_12, %c0_13], %12 {strides = array<i32>} : memref<16x96xf32, #tpu.memory_space<vmem>>, vector<16x96xf32>,
    } else {
    }
    return
  }
  func.func @transform_0(%arg0: i32, %arg1: i32, %arg2: i32) -> (i32, i32) {
    %c0_i32 = arith.constant 0 : i32
    return %arg0, %arg2 : i32, i32
  }
  func.func @transform_1(%arg0: i32, %arg1: i32, %arg2: i32) -> (i32, i32) {
    %c0_i32 = arith.constant 0 : i32
    return %arg2, %arg1 : i32, i32
  }
  func.func @transform_2(%arg0: i32, %arg1: i32, %arg2: i32) -> (i32, i32) {
    %c0_i32 = arith.constant 0 : i32
    return %arg0, %arg1 : i32, i32
  }
}

</mosaic_0001>

<llo_original>
// kernel: tpu_custom_call.1
$region0: #{tpu_custom_call.1}
  #allocation0 [shape = 'u32[]', space=smem, size = 0x4, offset = 0x4, fixed_abs, tag = 'smem constant byte address 0x4 - core index']
  #allocation1 [shape = 'u32[72,128]{1,0:T(1,128)}', space=vmem, size = 0x9000, scoped, tag = 'internal scratch']
  #allocation2 [shape = 'f32[16,96]{1,0:T(8,128)}', space=vmem, size = 0x2000, scoped, tag = 'scratch operand']
  %s0 = inlined_call_operand.hbm [shape: f32[16,32], index: 0, kind: input, shape index: {}]
  %s1 = inlined_call_operand.hbm [shape: f32[32,96], index: 1, kind: input, shape index: {}]
  %s2 = inlined_call_operand.hbm [shape: f32[16,96], index: 2, kind: output, shape index: {}]
  %s3 = sld [smem:[#allocation0]]
  $region34: #{tpu_custom_call.1} parent=0
    _
  %s5 = ssub.s32 1, %s3
  %s6 = scalar_select 0, %s5, %s3
  $region1: #{tpu_custom_call.1} parent=0
    #allocation3 [shape = 'u8[8192]{0}', space=vmem, size = 0x2000, scoped, tag = 'input window, operand 0, single buffered']
    #allocation4 [shape = 's32[1]{0}', space=sflag, size = 0x4, scoped, tag = 'scoped memory for tpu_custom_call.1']
    #allocation5 [shape = 's32[1]{0}', space=sflag, size = 0x4, scoped, tag = 'scoped memory for tpu_custom_call.1']
    #allocation6 [shape = 'u8[16384]{0}', space=vmem, size = 0x4000, scoped, tag = 'input window, operand 1, single buffered']
    #allocation7 [shape = 's32[1]{0}', space=sflag, size = 0x4, scoped, tag = 'scoped memory for tpu_custom_call.1']
    #allocation8 [shape = 'u8[8192]{0}', space=vmem, size = 0x2000, scoped, tag = 'output window, operand 0, single buffered']
    %7 = vsyncpa [#allocation4], 0
    %8 = vsyncpa [#allocation7], 0
    %9 = vsyncpa [#allocation5], 0
    // Predicated region
    $region2: #{tpu_custom_call.1} parent=1 // pred_check
      _
    $region3: #{tpu_custom_call.1} parent=1 // pred_check_branch
      %11 = sbr.rel (0) target = $region5
    $region4: #{tpu_custom_call.1} parent=1 // pred_region
      %13 = vsyncadd [#allocation4], 0
      %s14 = sshll.u32 %s0, 4
      %s15 = int_to_ptr.hbm [resolvable:$true] %s14
      %s16 = sshll.u32 [#allocation3], 4
      %s17 = int_to_ptr.vmem [resolvable:$true] %s16
      %22 = dma.hbm_to_vmem [thread:$0]  %s15, 256, %s17, [#allocation4], 128, 128, 8
    $region5: #{tpu_custom_call.1} parent=1 // pred_fallthru
      _
    // Predicated region
    $region6: #{tpu_custom_call.1} parent=1 // pred_check
      _
    $region7: #{tpu_custom_call.1} parent=1 // pred_check_branch
      %24 = sbr.rel (0) target = $region9
    $region8: #{tpu_custom_call.1} parent=1 // pred_region
      %26 = vsyncadd [#allocation7], 0
      %s27 = sshll.u32 %s1, 4
      %s28 = int_to_ptr.hbm [resolvable:$true] %s27
      %s29 = sshll.u32 [#allocation6], 4
      %s30 = int_to_ptr.vmem [resolvable:$true] %s29
      %35 = dma.hbm_to_vmem [thread:$0]  %s28, 512, %s30, [#allocation7], 128, 128, 8
    $region9: #{tpu_custom_call.1} parent=1 // pred_fallthru
      _
    // Predicated region
    $region10: #{tpu_custom_call.1} parent=1 // pred_check
      _
    $region11: #{tpu_custom_call.1} parent=1 // pred_check_branch
      %37 = sbr.rel (0) target = $region13
    $region12: #{tpu_custom_call.1} parent=1 // pred_region
      %39 = dma.done [#allocation4], 256
    $region13: #{tpu_custom_call.1} parent=1 // pred_fallthru
      _
    // Predicated region
    $region14: #{tpu_custom_call.1} parent=1 // pred_check
      _
    $region15: #{tpu_custom_call.1} parent=1 // pred_check_branch
      %41 = sbr.rel (0) target = $region17
    $region16: #{tpu_custom_call.1} parent=1 // pred_region
      %43 = dma.done [#allocation7], 512
    $region17: #{tpu_custom_call.1} parent=1 // pred_fallthru
      _
    %p44 = scmp.eq.s32.totalorder 0, 0
    // Predicated region
    $region18: #{tpu_custom_call.1} parent=1 // pred_check
      %p45 = pneg %p44
    $region19: #{tpu_custom_call.1} parent=1 // pred_check_branch
      %47 = sbr.rel (%p45) target = $region21
    $region20: #{tpu_custom_call.1} parent=1 // pred_region
      %vm48 = vcmask 785408
      %49 = vst.msk [vmem:[#allocation2] sm:$0xff] %vm48, 0.0
      %50 = vst.msk [vmem:[#allocation2 + $0x8] sm:$0xff] %vm48, 0.0
    $region21: #{tpu_custom_call.1} parent=1 // pred_fallthru
      _
    %v51 = vld [vmem:[#allocation2] sm:$0xff]
    %v52 = vld [vmem:[#allocation2 + $0x8] sm:$0xff]
    %v53 = vld [vmem:[#allocation3] sm:$0xff]
    %v54 = vld [vmem:[#allocation3 + $0x8] sm:$0xff]
    %v55 = vld [vmem:[#allocation6] sm:$0xff]
    %v56 = vld [vmem:[#allocation6 + $0x8] sm:$0xff]
    %v57 = vld [vmem:[#allocation6 + $0x10] sm:$0xff]
    %v58 = vld [vmem:[#allocation6 + $0x18] sm:$0xff]
    %vm59 = vcmask 261120
    %v61 = vsel %vm59, %v53, 0
    %v64 = vsel %vm59, %v54, 0
    %66 = vmatpush.msra.mxu0 0.0
    %67 = vmatpush.msra.mxu0 0.0
    %68 = vmatpush.msra.mxu0 0.0
    %69 = vmatpush.msra.mxu0 0.0
    %70 = vmatpush.msra.mxu0 0.0
    %71 = vmatpush.msra.mxu0 0.0
    %72 = vmatpush.msra.mxu0 0.0
    %73 = vmatpush.msra.mxu0 0.0
    %74 = vmatpush.msra.mxu0 0.0
    %75 = vmatpush.msra.mxu0 0.0
    %76 = vmatpush.msra.mxu0 0.0
    %77 = vmatpush.msra.mxu0 0.0
    %78 = vmatpush.msra.mxu0 %v58
    %79 = vmatpush.msra.mxu0 %v57
    %80 = vmatpush.msra.mxu0 %v56
    %81 = vmatpush.msra.mxu0 %v55
    %82 = vmatmul.f32.gmra.mxu0 %v61
    %v83 = vpop.f32.mrf.mxu0
    %v84 = vadd.f32 0.0, %v83
    %85 = vmatmul.f32.gmra.mxu0 %v64
    %v86 = vpop.f32.mrf.mxu0
    %v87 = vadd.f32 0.0, %v86
    %88 = vdwg.mxu0
    %v89 = vadd.f32 %v51, %v84
    %v90 = vadd.f32 %v52, %v87
    %vm91 = vcmask 785408
    %92 = vst.msk [vmem:[#allocation2] sm:$0xff] %vm91, %v89
    %93 = vst.msk [vmem:[#allocation2 + $0x8] sm:$0xff] %vm91, %v90
    // Predicated region
    $region22: #{tpu_custom_call.1} parent=1 // pred_check
      %p94 = pneg %p44
    $region23: #{tpu_custom_call.1} parent=1 // pred_check_branch
      %96 = sbr.rel (%p94) target = $region25
    $region24: #{tpu_custom_call.1} parent=1 // pred_region
      %v97 = vld [vmem:[#allocation2] sm:$0xff]
      %v98 = vld [vmem:[#allocation2 + $0x8] sm:$0xff]
      %99 = vst.msk [vmem:[#allocation8] sm:$0xff] %vm91, %v97
      %100 = vst.msk [vmem:[#allocation8 + $0x8] sm:$0xff] %vm91, %v98
    $region25: #{tpu_custom_call.1} parent=1 // pred_fallthru
      _
    // Predicated region
    $region26: #{tpu_custom_call.1} parent=1 // pred_check
      _
    $region27: #{tpu_custom_call.1} parent=1 // pred_check_branch
      %102 = sbr.rel (0) target = $region29
    $region28: #{tpu_custom_call.1} parent=1 // pred_region
      %104 = vsyncadd [#allocation5], 0
      %s105 = sshll.u32 [#allocation8], 4
      %s106 = int_to_ptr.vmem [resolvable:$true] %s105
      %s107 = sshll.u32 %s2, 4
      %s108 = int_to_ptr.hbm [resolvable:$true] %s107
      %113 = dma.vmem_to_hbm [thread:$0]  %s106, 256, %s108, [#allocation5], 128, 128, 8
    $region29: #{tpu_custom_call.1} parent=1 // pred_fallthru
      _
    // Predicated region
    $region30: #{tpu_custom_call.1} parent=1 // pred_check
      _
    $region31: #{tpu_custom_call.1} parent=1 // pred_check_branch
      %115 = sbr.rel (0) target = $region33
    $region32: #{tpu_custom_call.1} parent=1 // pred_region
      %117 = dma.done [#allocation5], 256
    $region33: #{tpu_custom_call.1} parent=1 // pred_fallthru
      _
    %118 = vsyncpa [#allocation4], 1
    %119 = vsyncpa [#allocation7], 1
    %120 = vsyncpa [#allocation5], 1

</llo_original>
